<compile_context>
chip_gen: v5e
topology: v5e:2x2
jax: 0.10.0
libtpu: 0.0.40
codegen_flags: <defaults>
</compile_context>

<pallas_src>
import functools

import jax
import jax.numpy as jnp
from jax.experimental import pallas as pl
from jax.experimental.pallas import tpu as pltpu


# ---------------------------------------------------------------------------
# Budgets
# ---------------------------------------------------------------------------

_VMEM_LIMIT_BYTES = 48 * 1024 * 1024     # explicit scoped-VMEM limit (all gens)
_FUSED_SLAB_BYTES = 4 * 1024 * 1024      # per-step slab budget (padded) for fused path
_STREAM_TILE_BYTES = 4 * 1024 * 1024     # per-step data tile for streaming path
_MAX_LANES = 2048                        # hw tile cap (multiple of 128)
_C_TILE_CAP = 256                        # caps lane-padded (c_tile, 1) buffers


def _round_up(v, m):
    return ((v + m - 1) // m) * m


def _padded_slab_bytes(n, c_tile, hw, itemsize):
    """VMEM footprint of an (n, c_tile, hw) tile incl. sublane/lane padding."""
    return n * _round_up(c_tile, 8) * _round_up(hw, 128) * itemsize


# ---------------------------------------------------------------------------
# Kernels
# ---------------------------------------------------------------------------

def _bn_fused_kernel(x_ref, w_ref, b_ref, o_ref, *, inv_count, eps):
    """Single-pass BN over a full (N, c_tile, HW) channel slab.

    Centered statistics (no E[x^2]-E[x]^2 cancellation).
    """
    x = x_ref[...].astype(jnp.float32)                       # (N, c_tile, HW)

    xs = jnp.sum(x, axis=0)                                  # (c_tile, HW)
    mean_c = jnp.sum(xs, axis=-1, keepdims=True) * jnp.float32(inv_count)
    mean = mean_c[None]                                      # (1, c_tile, 1)

    centered = x - mean
    c2 = jnp.sum(centered * centered, axis=0)                # (c_tile, HW)
    var_c = jnp.sum(c2, axis=-1, keepdims=True) * jnp.float32(inv_count)

    inv_std = jax.lax.rsqrt(var_c + jnp.float32(eps))        # (c_tile, 1)
    scale = w_ref[...] * inv_std                             # (c_tile, 1)
    shift = b_ref[...] - mean_c * scale                      # (c_tile, 1)

    o_ref[...] = (x * scale[None] + shift[None]).astype(o_ref.dtype)


def _bn_stats_kernel(x_ref, sum_ref, sq_ref, *,
                     n_total, hw_total, n_tile, hw_tile, mask_n, mask_hw):
    """Accumulate per-channel sum and sum-of-squares (streaming pass 1).

    x_ref:   (n_tile, c_tile, hw_tile) input tile
    sum_ref: (c_tile, 1) f32 resident accumulator
    sq_ref:  (c_tile, 1) f32 resident accumulator
    Grid: (c_steps, n_steps, hw_steps); reduction over grid axes 1 and 2.
    Boundary tiles along N / HW are masked; channel-tail rows are garbage but
    per-channel rows are independent and the tail output rows are discarded.
    """
    @pl.when((pl.program_id(1) == 0) & (pl.program_id(2) == 0))
    def _():
        sum_ref[...] = jnp.zeros_like(sum_ref)
        sq_ref[...] = jnp.zeros_like(sq_ref)

    x = x_ref[...].astype(jnp.float32)                       # (n_t, c_t, hw_t)

    if mask_n or mask_hw:
        mask = None
        if mask_n:
            n_ids = (jax.lax.broadcasted_iota(jnp.int32, x.shape, 0)
                     + pl.program_id(1) * n_tile)
            mask = n_ids < n_total
        if mask_hw:
            hw_ids = (jax.lax.broadcasted_iota(jnp.int32, x.shape, 2)
                      + pl.program_id(2) * hw_tile)
            m2 = hw_ids < hw_total
            mask = m2 if mask is None else (mask & m2)
        x = jnp.where(mask, x, jnp.float32(0.0))

    xs = jnp.sum(x, axis=0)                                  # (c_t, hw_t)
    xq = jnp.sum(x * x, axis=0)                              # (c_t, hw_t)
    sum_ref[...] += jnp.sum(xs, axis=1, keepdims=True)       # (c_t, 1)
    sq_ref[...] += jnp.sum(xq, axis=1, keepdims=True)        # (c_t, 1)


def _bn_norm_kernel(x_ref, scale_ref, shift_ref, o_ref):
    """o = x * scale + shift with per-channel scale/shift (streaming pass 2)."""
    x = x_ref[...].astype(jnp.float32)                       # (n_t, c_t, hw_t)
    scale = scale_ref[...][None]                             # (1, c_t, 1)
    shift = shift_ref[...][None]                             # (1, c_t, 1)
    o_ref[...] = (x * scale + shift).astype(o_ref.dtype)
    # NOTE: boundary-tile writes past the array extent are discarded by Pallas.


# ---------------------------------------------------------------------------
# Path selection helpers
# ---------------------------------------------------------------------------

def _fused_c_tile(n, c, hw, itemsize, slab_budget):
    """Channel tile for the fused path, or None if no slab fits the budget.

    Candidates are divisors of C that are multiples of 8, plus full C (both
    always-legal block shapes -> no channel tail / no masking, exact count).
    Prefers >=2 channel steps so both v7x TensorCores get work.
    """
    cands = {c}
    cands.update(d for d in range(8, c, 8) if c % d == 0)
    fitting = [ct for ct in cands
               if _padded_slab_bytes(n, ct, hw, itemsize) <= slab_budget]
    if not fitting:
        return None
    multi = [ct for ct in fitting if c // ct >= 2]
    return max(multi) if multi else max(fitting)


# ---------------------------------------------------------------------------
# Pallas-call wrappers
# ---------------------------------------------------------------------------

def _bn_fused(x3, w, b, c_tile, eps):
    n, c, hw = x3.shape
    c_steps = pl.cdiv(c, c_tile)
    kernel = functools.partial(_bn_fused_kernel,
                               inv_count=1.0 / float(n * hw), eps=float(eps))
    return pl.pallas_call(
        kernel,
        out_shape=jax.ShapeDtypeStruct((n, c, hw), x3.dtype),
        grid_spec=pltpu.PrefetchScalarGridSpec(
            num_scalar_prefetch=0,
            grid=(c_steps,),
            in_specs=[
                pl.BlockSpec((n, c_tile, hw), lambda ci: (0, ci, 0)),
                pl.BlockSpec((c_tile, 1), lambda ci: (ci, 0)),
                pl.BlockSpec((c_tile, 1), lambda ci: (ci, 0)),
            ],
            out_specs=pl.BlockSpec((n, c_tile, hw), lambda ci: (0, ci, 0)),
        ),
        compiler_params=pltpu.CompilerParams(
            dimension_semantics=("parallel",),
            vmem_limit_bytes=_VMEM_LIMIT_BYTES),
    )(x3, w, b)


def _bn_two_pass(x3, w, b, eps):
    n, c, hw = x3.shape
    itemsize = jnp.dtype(x3.dtype).itemsize
    target_elems = max(1, _STREAM_TILE_BYTES // itemsize)

    # Lane-dense HW tile: full HW when small, else a multiple of 128 (tail
    # handled by cdiv + masking).
    hw_tile = hw if hw <= _MAX_LANES else _MAX_LANES
    # Channel tile: full C when small, else capped multiple of 8.
    c_tile = c if c <= _C_TILE_CAP else _C_TILE_CAP
    # Guarantee >=2 channel steps (the only parallel axis of pass 1) for v7x
    # megacore whenever a legal multiple-of-8 split exists.
    if pl.cdiv(c, c_tile) == 1 and c >= 16:
        half = _round_up(pl.cdiv(c, 2), 8)
        if half < c:
            c_tile = half
    # Fill the remaining tile budget with batch rows (padded accounting).
    n_tile = max(1, min(n, target_elems
                        // (_round_up(c_tile, 8) * _round_up(hw_tile, 128))))

    c_steps = pl.cdiv(c, c_tile)
    n_steps = pl.cdiv(n, n_tile)
    hw_steps = pl.cdiv(hw, hw_tile)

    # ---------------- Pass 1: per-channel sum / sum-of-squares --------------
    stats_kernel = functools.partial(
        _bn_stats_kernel,
        n_total=n, hw_total=hw, n_tile=n_tile, hw_tile=hw_tile,
        mask_n=(n % n_tile != 0), mask_hw=(hw % hw_tile != 0))

    sums, sqs = pl.pallas_call(
        stats_kernel,
        out_shape=(
            jax.ShapeDtypeStruct((c, 1), jnp.float32),
            jax.ShapeDtypeStruct((c, 1), jnp.float32),
        ),
        grid_spec=pltpu.PrefetchScalarGridSpec(
            num_scalar_prefetch=0,
            grid=(c_steps, n_steps, hw_steps),
            in_specs=[
                pl.BlockSpec((n_tile, c_tile, hw_tile),
                             lambda ci, ni, hi: (ni, ci, hi)),
            ],
            out_specs=[
                pl.BlockSpec((c_tile, 1), lambda ci, ni, hi: (ci, 0)),
                pl.BlockSpec((c_tile, 1), lambda ci, ni, hi: (ci, 0)),
            ],
        ),
        compiler_params=pltpu.CompilerParams(
            dimension_semantics=("parallel", "arbitrary", "arbitrary"),
            vmem_limit_bytes=_VMEM_LIMIT_BYTES),
    )(x3)

    # Finalize statistics, fold affine into per-channel scale/shift (O(C)).
    inv_m = jnp.float32(1.0 / (n * hw))
    mean = sums * inv_m                                      # (C, 1)
    var = jnp.maximum(sqs * inv_m - mean * mean, 0.0)        # biased variance
    inv_std = jax.lax.rsqrt(var + jnp.float32(eps))
    scale = w * inv_std                                      # (C, 1)
    shift = b - mean * scale                                 # (C, 1)

    # ---------------- Pass 2: normalize (one mul + one add per element) -----
    out3 = pl.pallas_call(
        _bn_norm_kernel,
        out_shape=jax.ShapeDtypeStruct((n, c, hw), x3.dtype),
        grid_spec=pltpu.PrefetchScalarGridSpec(
            num_scalar_prefetch=0,
            grid=(c_steps, n_steps, hw_steps),
            in_specs=[
                pl.BlockSpec((n_tile, c_tile, hw_tile),
                             lambda ci, ni, hi: (ni, ci, hi)),
                pl.BlockSpec((c_tile, 1), lambda ci, ni, hi: (ci, 0)),
                pl.BlockSpec((c_tile, 1), lambda ci, ni, hi: (ci, 0)),
            ],
            out_specs=pl.BlockSpec((n_tile, c_tile, hw_tile),
                                   lambda ci, ni, hi: (ni, ci, hi)),
        ),
        compiler_params=pltpu.CompilerParams(
            dimension_semantics=("parallel", "parallel", "parallel"),
            vmem_limit_bytes=_VMEM_LIMIT_BYTES),
    )(x3, scale, shift)
    return out3


def batchnorm2d_train(x, weight, bias, *, eps=1e-5, _force_two_pass=False):
    """BatchNorm2d forward in training mode (batch statistics).

    x:      (N, C, H, W) float
    weight: (C,) float
    bias:   (C,) float
    Returns (N, C, H, W) in x.dtype.
    """
    n, c, h, w_dim = x.shape
    hw = h * w_dim
    itemsize = jnp.dtype(x.dtype).itemsize

    x3 = x.reshape(n, c, hw)                       # free, contiguous reshape
    w = weight.astype(jnp.float32).reshape(c, 1)
    b = bias.astype(jnp.float32).reshape(c, 1)

    c_tile = None if _force_two_pass else _fused_c_tile(
        n, c, hw, itemsize, _FUSED_SLAB_BYTES)
    if c_tile is not None:
        out3 = _bn_fused(x3, w, b, c_tile, eps)
    else:
        out3 = _bn_two_pass(x3, w, b, eps)
    return out3.reshape(n, c, h, w_dim)


# ---------------------------------------------------------------------------
# Reference + test
# ---------------------------------------------------------------------------

def _reference_bn_train(x, weight, bias, eps=1e-5):
    mean = jnp.mean(x, axis=(0, 2, 3), keepdims=True)
    var = jnp.mean((x - mean) ** 2, axis=(0, 2, 3), keepdims=True)
    w = weight.reshape(1, -1, 1, 1)
    b = bias.reshape(1, -1, 1, 1)
    return (x - mean) / jnp.sqrt(var + eps) * w + b


if __name__ == "__main__":
    key = jax.random.PRNGKey(0)
    eps = 1e-5

    # --- Main test: fused single-pass path (module-consistent small shape) ---
    N, C, H, W = 2, 4, 16, 16
    kx, kw, kb, k2 = jax.random.split(key, 4)
    x = jax.random.normal(kx, (N, C, H, W), dtype=jnp.float32)
    weight = jnp.ones((C,), jnp.float32) + 0.1 * jax.random.normal(
        kw, (C,), jnp.float32)
    bias = jnp.zeros((C,), jnp.float32) + 0.1 * jax.random.normal(
        kb, (C,), jnp.float32)

    out = jax.block_until_ready(batchnorm2d_train(x, weight, bias, eps=eps))
    ref = _reference_bn_train(x, weight, bias, eps=eps)
    assert out.shape == (N, C, H, W)
    assert jnp.max(jnp.abs(out - ref)) < 1e-4

    # --- Secondary test: exercise the two-pass streaming path (with an HW
    #     boundary tile + channel split) on a still-small shape. -------------
    N2, C2, H2, W2 = 3, 16, 48, 48
    x2 = jax.random.normal(k2, (N2, C2, H2, W2), dtype=jnp.float32)
    w2 = jnp.ones((C2,), jnp.float32) * 1.3
    b2 = jnp.ones((C2,), jnp.float32) * -0.2
    out2 = jax.block_until_ready(
        batchnorm2d_train(x2, w2, b2, eps=eps, _force_two_pass=True))
    ref2 = _reference_bn_train(x2, w2, b2, eps=eps)
    assert jnp.max(jnp.abs(out2 - ref2)) < 1e-4

    print("KERNEL_OK")
</pallas_src>

<mosaic_0001>
module attributes {stable_mosaic.version = 11 : i64} {
  func.func @_bn_fused_kernel(%arg0: i32, %arg1: memref<2x4x256xf32, #tpu.memory_space<vmem>>, %arg2: memref<4x1xf32, #tpu.memory_space<vmem>>, %arg3: memref<4x1xf32, #tpu.memory_space<vmem>>, %arg4: memref<2x4x256xf32, #tpu.memory_space<vmem>>) attributes {dimension_semantics = [#tpu.dimension_semantics<parallel>], iteration_bounds = array<i64: 1>, scalar_prefetch = 0 : i64, scratch_operands = 0 : i64, tpu.core_type = #tpu.core_type<tc>, window_params = [{transform_indices = @transform_0, window_bounds = array<i64: 2, 4, 256>}, {transform_indices = @transform_1, window_bounds = array<i64: 4, 1>}, {transform_indices = @transform_2, window_bounds = array<i64: 4, 1>}, {transform_indices = @transform_3, window_bounds = array<i64: 2, 4, 256>}]} {
    %c0 = arith.constant 0 : index
    %c0_0 = arith.constant 0 : index
    %c0_1 = arith.constant 0 : index
    %0 = vector.load %arg1[%c0, %c0_0, %c0_1] : memref<2x4x256xf32, #tpu.memory_space<vmem>>, vector<2x4x256xf32>
    %cst = arith.constant dense<0.000000e+00> : vector<4x256xf32>
    %1 = vector.multi_reduction <add>, %0, %cst [0] : vector<2x4x256xf32> to vector<4x256xf32>
    %cst_2 = arith.constant dense<0.000000e+00> : vector<4xf32>
    %2 = vector.multi_reduction <add>, %1, %cst_2 [1] : vector<4x256xf32> to vector<4xf32>
    %3 = vector.shape_cast %2 : vector<4xf32> to vector<4x1xf32>
    %cst_3 = arith.constant 0.001953125 : f32
    %4 = vector.broadcast %cst_3 : f32 to vector<4x1xf32>
    %5 = arith.mulf %3, %4 : vector<4x1xf32>
    %6 = vector.shape_cast %5 : vector<4x1xf32> to vector<1x4x1xf32>
    %7 = vector.broadcast %6 : vector<1x4x1xf32> to vector<2x4x256xf32>
    %8 = arith.subf %0, %7 : vector<2x4x256xf32>
    %9 = arith.mulf %8, %8 : vector<2x4x256xf32>
    %cst_4 = arith.constant dense<0.000000e+00> : vector<4x256xf32>
    %10 = vector.multi_reduction <add>, %9, %cst_4 [0] : vector<2x4x256xf32> to vector<4x256xf32>
    %cst_5 = arith.constant dense<0.000000e+00> : vector<4xf32>
    %11 = vector.multi_reduction <add>, %10, %cst_5 [1] : vector<4x256xf32> to vector<4xf32>
    %12 = vector.shape_cast %11 : vector<4xf32> to vector<4x1xf32>
    %cst_6 = arith.constant 0.001953125 : f32
    %13 = vector.broadcast %cst_6 : f32 to vector<4x1xf32>
    %14 = arith.mulf %12, %13 : vector<4x1xf32>
    %cst_7 = arith.constant 9.99999974E-6 : f32
    %15 = vector.broadcast %cst_7 : f32 to vector<4x1xf32>
    %16 = arith.addf %14, %15 : vector<4x1xf32>
    %17 = math.rsqrt %16 : vector<4x1xf32>
    %c0_8 = arith.constant 0 : index
    %c0_9 = arith.constant 0 : index
    %18 = vector.load %arg2[%c0_8, %c0_9] : memref<4x1xf32, #tpu.memory_space<vmem>>, vector<4x1xf32>
    %19 = arith.mulf %18, %17 : vector<4x1xf32>
    %c0_10 = arith.constant 0 : index
    %c0_11 = arith.constant 0 : index
    %20 = vector.load %arg3[%c0_10, %c0_11] : memref<4x1xf32, #tpu.memory_space<vmem>>, vector<4x1xf32>
    %21 = arith.mulf %5, %19 : vector<4x1xf32>
    %22 = arith.subf %20, %21 : vector<4x1xf32>
    %23 = vector.shape_cast %19 : vector<4x1xf32> to vector<1x4x1xf32>
    %24 = vector.broadcast %23 : vector<1x4x1xf32> to vector<2x4x256xf32>
    %25 = arith.mulf %0, %24 : vector<2x4x256xf32>
    %26 = vector.shape_cast %22 : vector<4x1xf32> to vector<1x4x1xf32>
    %27 = vector.broadcast %26 : vector<1x4x1xf32> to vector<2x4x256xf32>
    %28 = arith.addf %25, %27 : vector<2x4x256xf32>
    %c0_12 = arith.constant 0 : index
    %c0_13 = arith.constant 0 : index
    %c0_14 = arith.constant 0 : index
    %29 = vector.load %arg4[%c0_12, %c0_13, %c0_14] : memref<2x4x256xf32, #tpu.memory_space<vmem>>, vector<2x4x256xf32>
    tpu.vector_store %arg4[%c0_12, %c0_13, %c0_14], %28 {strides = array<i32>} : memref<2x4x256xf32, #tpu.memory_space<vmem>>, vector<2x4x256xf32>,
    return
  }
  func.func @transform_0(%arg0: i32) -> (i32, i32, i32) {
    %c0_i32 = arith.constant 0 : i32
    %c0_i32_0 = arith.constant 0 : i32
    %c0_i32_1 = arith.constant 0 : i32
    return %c0_i32, %arg0, %c0_i32_0 : i32, i32, i32
  }
  func.func @transform_1(%arg0: i32) -> (i32, i32) {
    %c0_i32 = arith.constant 0 : i32
    %c0_i32_0 = arith.constant 0 : i32
    return %arg0, %c0_i32 : i32, i32
  }
  func.func @transform_2(%arg0: i32) -> (i32, i32) {
    %c0_i32 = arith.constant 0 : i32
    %c0_i32_0 = arith.constant 0 : i32
    return %arg0, %c0_i32 : i32, i32
  }
  func.func @transform_3(%arg0: i32) -> (i32, i32, i32) {
    %c0_i32 = arith.constant 0 : i32
    %c0_i32_0 = arith.constant 0 : i32
    %c0_i32_1 = arith.constant 0 : i32
    return %c0_i32, %arg0, %c0_i32_0 : i32, i32, i32
  }
}

</mosaic_0001>

<llo_original>
// kernel: tpu_custom_call.1
$region0: #{tpu_custom_call.1}
  #allocation0 [shape = 'u32[]', space=smem, size = 0x4, offset = 0x4, fixed_abs, tag = 'smem constant byte address 0x4 - core index']
  #allocation1 [shape = 'u32[72,128]{1,0:T(1,128)}', space=vmem, size = 0x9000, scoped, tag = 'internal scratch']
  %s0 = inlined_call_operand.hbm [shape: f32[2,4,256], index: 0, kind: input, shape index: {}]
  %s1 = inlined_call_operand.vmem [shape: f32[4,1], index: 1, kind: input, shape index: {}]
  %s2 = inlined_call_operand.vmem [shape: f32[4,1], index: 2, kind: input, shape index: {}]
  %s3 = inlined_call_operand.hbm [shape: f32[2,4,256], index: 3, kind: output, shape index: {}]
  %s4 = sld [smem:[#allocation0]]
  $region26: #{tpu_custom_call.1} parent=0
    _
  %s6 = ssub.s32 1, %s4
  %s7 = scalar_select 0, %s6, %s4
  $region1: #{tpu_custom_call.1} parent=0
    #allocation2 [shape = 'u8[8192]{0}', space=vmem, size = 0x2000, scoped, tag = 'input window, operand 0, single buffered']
    #allocation3 [shape = 's32[1]{0}', space=sflag, size = 0x4, scoped, tag = 'scoped memory for tpu_custom_call.1']
    #allocation4 [shape = 's32[1]{0}', space=sflag, size = 0x4, scoped, tag = 'scoped memory for tpu_custom_call.1']
    #allocation5 [shape = 'u8[8192]{0}', space=vmem, size = 0x2000, scoped, tag = 'output window, operand 0, single buffered']
    %8 = vsyncpa [#allocation3], 0
    %9 = vsyncpa [#allocation4], 0
    // Predicated region
    $region2: #{tpu_custom_call.1} parent=1 // pred_check
      _
    $region3: #{tpu_custom_call.1} parent=1 // pred_check_branch
      %11 = sbr.rel (0) target = $region5
    $region4: #{tpu_custom_call.1} parent=1 // pred_region
      %13 = vsyncadd [#allocation3], 0
      %s14 = sshll.u32 %s0, 4
      %s15 = int_to_ptr.hbm [resolvable:$true] %s14
      %s16 = sshll.u32 [#allocation2], 4
      %s17 = int_to_ptr.vmem [resolvable:$true] %s16
      %22 = dma.hbm_to_vmem [thread:$0]  %s15, 256, %s17, [#allocation3], 128, 128, 8
    $region5: #{tpu_custom_call.1} parent=1 // pred_fallthru
      _
    // Predicated region
    $region6: #{tpu_custom_call.1} parent=1 // pred_check
      _
    $region7: #{tpu_custom_call.1} parent=1 // pred_check_branch
      %24 = sbr.rel (0) target = $region9
    $region8: #{tpu_custom_call.1} parent=1 // pred_region
      _
    $region9: #{tpu_custom_call.1} parent=1 // pred_fallthru
      _
    // Predicated region
    $region10: #{tpu_custom_call.1} parent=1 // pred_check
      _
    $region11: #{tpu_custom_call.1} parent=1 // pred_check_branch
      %26 = sbr.rel (0) target = $region13
    $region12: #{tpu_custom_call.1} parent=1 // pred_region
      _
    $region13: #{tpu_custom_call.1} parent=1 // pred_fallthru
      _
    // Predicated region
    $region14: #{tpu_custom_call.1} parent=1 // pred_check
      _
    $region15: #{tpu_custom_call.1} parent=1 // pred_check_branch
      %28 = sbr.rel (0) target = $region17
    $region16: #{tpu_custom_call.1} parent=1 // pred_region
      %30 = dma.done [#allocation3], 256
    $region17: #{tpu_custom_call.1} parent=1 // pred_fallthru
      _
    %v31 = vld [vmem:[#allocation2] sm:$0xff]
    %v32 = vld [vmem:[#allocation2 + $0x8] sm:$0xff]
    %35 = vst [vmem:[#allocation1] ss:$2 sm:$0xff] %v31
    %v36 = vld.sshfl [vmem:[#allocation1] sm:$0xff pattern:$0x75316420]
    %v37 = vld.sshfl [vmem:[#allocation1 + $0x8] sm:$0xff pattern:$0x75316420]
    %s38 = scalar_lea.vmem [#allocation1], 16
    %39 = vst [vmem:[%s38] ss:$2 sm:$0xff] %v32
    %v40 = vld.sshfl [vmem:[#allocation1 + $0x10] sm:$0xff pattern:$0x75316420]
    %v41 = vld.sshfl [vmem:[#allocation1 + $0x18] sm:$0xff pattern:$0x75316420]
    %vm46 = vcmask 1043456
    %v47 = vsel %vm46, %v36, 0.0
    %v48 = vsel %vm46, %v40, 0.0
    %v49 = vadd.f32 %v47, %v48
    %v50 = vsel %vm46, %v37, 0.0
    %v51 = vsel %vm46, %v41, 0.0
    %v52 = vadd.f32 %v50, %v51
    %v53 = vsel %vm46, %v49, 0.0
    %v54 = vsel %vm46, %v52, 0.0
    %v55 = vadd.f32 %v53, %v54
    %56 = vadd.xlane.f32.xlu0 %v55
    %v57 = vpop.xlane.xlu0 %56
    %v58 = vmul.f32 %v57, 0.001953125
    %v61 = vunpack.c.l.s4 839922192
    %v62 = vunpack.c.0.s8 %v61
    %v63 = vperm.slane %v58, %v62
    %v65 = vsub.f32 %v31, %v63
    %v66 = vsub.f32 %v32, %v63
    %v67 = vmul.f32 %v65, %v65
    %v68 = vmul.f32 %v66, %v66
    %71 = vst [vmem:[#allocation1] ss:$2 sm:$0xff] %v67
    %v72 = vld.sshfl [vmem:[#allocation1] sm:$0xff pattern:$0x75316420]
    %v73 = vld.sshfl [vmem:[#allocation1 + $0x8] sm:$0xff pattern:$0x75316420]
    %s74 = scalar_lea.vmem [#allocation1], 16
    %75 = vst [vmem:[%s74] ss:$2 sm:$0xff] %v68
    %v76 = vld.sshfl [vmem:[#allocation1 + $0x10] sm:$0xff pattern:$0x75316420]
    %v77 = vld.sshfl [vmem:[#allocation1 + $0x18] sm:$0xff pattern:$0x75316420]
    %v82 = vsel %vm46, %v72, 0.0
    %v83 = vsel %vm46, %v76, 0.0
    %v84 = vadd.f32 %v82, %v83
    %v85 = vsel %vm46, %v73, 0.0
    %v86 = vsel %vm46, %v77, 0.0
    %v87 = vadd.f32 %v85, %v86
    %v88 = vsel %vm46, %v84, 0.0
    %v89 = vsel %vm46, %v87, 0.0
    %v90 = vadd.f32 %v88, %v89
    %91 = vadd.xlane.f32.xlu0 %v90
    %v92 = vpop.xlane.xlu0 %91
    %v93 = vmul.f32 %v92, 0.001953125
    %v94 = vadd.f32 %v93, 1e-05
    %v95 = vrsqrt.pop %v94
    %v96 = vmul.f32 %v95, %v94
    %v97 = vmul.f32 %v96, %v95
    %v98 = vmul.f32 0.5, %v97
    %v99 = vsub.f32 1.5, %v98
    %v100 = vmul.f32 %v95, %v99
    %vm101 = vweird.f32 %v94
    %vm102 = vweird.f32 %v95
    %vm103 = vmor %vm101, %vm102
    %v104 = vsel %vm103, %v95, %v100
    %v105 = vld [vmem:[%s1] sm:$0xf]
    %v106 = vmul.f32 %v105, %v104
    %v107 = vld [vmem:[%s2] sm:$0xf]
    %v108 = vmul.f32 %v58, %v106
    %v109 = vsub.f32 %v107, %v108
    %111 = vset.pattern.permute.xlu0 0
    %112 = vperm.xlu0 %111, %v106
    %v113 = vpop.permute.xlu0 %112
    %v115 = vunpack.c.l.s4 839922192
    %v116 = vunpack.c.0.s8 %v115
    %v117 = vperm.slane %v113, %v116
    %v119 = vmul.f32 %v31, %v117
    %v120 = vmul.f32 %v32, %v117
    %122 = vset.pattern.permute.xlu0 0
    %123 = vperm.xlu0 %122, %v109
    %v124 = vpop.permute.xlu0 %123
    %v126 = vunpack.c.l.s4 839922192
    %v127 = vunpack.c.0.s8 %v126
    %v128 = vperm.slane %v124, %v127
    %v130 = vadd.f32 %v119, %v128
    %v131 = vadd.f32 %v120, %v128
    %132 = vst [vmem:[#allocation5] sm:$0xff] %v130
    %133 = vst [vmem:[#allocation5 + $0x8] sm:$0xff] %v131
    // Predicated region
    $region18: #{tpu_custom_call.1} parent=1 // pred_check
      _
    $region19: #{tpu_custom_call.1} parent=1 // pred_check_branch
      %135 = sbr.rel (0) target = $region21
    $region20: #{tpu_custom_call.1} parent=1 // pred_region
      %137 = vsyncadd [#allocation4], 0
      %s138 = sshll.u32 [#allocation5], 4
      %s139 = int_to_ptr.vmem [resolvable:$true] %s138
      %s140 = sshll.u32 %s3, 4
      %s141 = int_to_ptr.hbm [resolvable:$true] %s140
      %146 = dma.vmem_to_hbm [thread:$0]  %s139, 256, %s141, [#allocation4], 128, 128, 8
    $region21: #{tpu_custom_call.1} parent=1 // pred_fallthru
      _
    // Predicated region
    $region22: #{tpu_custom_call.1} parent=1 // pred_check
      _
    $region23: #{tpu_custom_call.1} parent=1 // pred_check_branch
      %148 = sbr.rel (0) target = $region25
    $region24: #{tpu_custom_call.1} parent=1 // pred_region
      %150 = dma.done [#allocation4], 256
    $region25: #{tpu_custom_call.1} parent=1 // pred_fallthru
      _
    %151 = vsyncpa [#allocation3], 1
    %152 = vsyncpa [#allocation4], 1

</llo_original>
